<compile_context>
chip_gen: v7x
topology: tpu7x:2x2x1
jax: 0.10.0
libtpu: 0.0.40
codegen_flags: <defaults>
</compile_context>

<pallas_src>
import jax
import jax.numpy as jnp
from jax.experimental import pallas as pl
from jax.experimental.pallas import tpu as pltpu

_LANE = 128      # lane width (last-dim alignment)
_SUBLANE = 8     # sublane width (second-to-last-dim alignment)


def _round_up(x, m):
    return ((x + m - 1) // m) * m


def _make_fused_mlp_kernel(n_layers, compute_dtype):
    """Kernel body for a fixed (static) number of linear layers, all fused."""

    def kernel(*refs):
        # refs = (x_ref, w0_ref, b0_ref, w1_ref, b1_ref, ..., o_ref)
        x_ref = refs[0]
        o_ref = refs[-1]
        h = x_ref[...].astype(compute_dtype)            # bf16 operands -> native MXU dtype
        for i in range(n_layers):                       # static Python loop -> fully unrolled
            w_ref = refs[1 + 2 * i]                     # (K, N_pad), pre-transposed
            b_ref = refs[2 + 2 * i]                     # (1, N_pad)
            acc = jnp.dot(h, w_ref[...], preferred_element_type=jnp.float32)
            acc = acc + b_ref[...].astype(jnp.float32)  # f32 bias add
            h = acc if i == n_layers - 1 else acc.astype(compute_dtype)
        o_ref[...] = h.astype(o_ref.dtype)              # single lane-dense store

    return kernel


def fused_mlp_forward(x, padded_params, out_features, *,
                      compute_dtype=jnp.bfloat16, tm_max=512):
    """y = Linear_n(...Linear_1(x)...) with all layers fused in one pallas_call."""
    orig_shape = x.shape
    K0 = orig_shape[-1]
    x2 = x.reshape(-1, K0)                              # metadata-only reshape, no HBM copy
    M = x2.shape[0]
    n_layers = len(padded_params)
    if n_layers == 0:
        return x

    N_last_pad = padded_params[-1][0].shape[1]
    max_np = max(w.shape[1] for w, _ in padded_params)

    w_itemsize = jnp.dtype(compute_dtype).itemsize
    x_itemsize = jnp.dtype(x.dtype).itemsize
    weight_bytes = sum((w.size + b.size) * w_itemsize for w, b in padded_params)

    try:
        vmem_capacity = pltpu.get_tpu_info().vmem_capacity_bytes
    except Exception:
        vmem_capacity = 64 * 1024 * 1024                # conservative (v7x per-TC)
    usable = int(vmem_capacity * 0.75)                  # leave headroom for compiler scratch

    # Balanced batch tiles (minimize zero-row padding); force >= 2 grid steps when there is
    # enough work so ("parallel",) can shard the batch across both v7x TensorCores.
    n_tiles = pl.cdiv(M, tm_max)
    if M >= 2 * _SUBLANE:
        n_tiles = max(n_tiles, 2)
    tm = _round_up(pl.cdiv(M, n_tiles), _SUBLANE)

    def footprint(tm_, w_bufs):
        act_in = 2 * tm_ * K0 * x_itemsize              # double-buffered input tile
        act_out = 2 * tm_ * N_last_pad * x_itemsize     # double-buffered output tile
        inter = 4 * tm_ * max_np * 4                    # f32 intermediates / regalloc headroom
        return weight_bytes * w_bufs + act_in + act_out + inter

    while footprint(tm, 1) > usable and tm > _SUBLANE:  # shrink batch tile if it cannot fit
        tm = _round_up(max(tm // 2, _SUBLANE), _SUBLANE)
    # TODO(synk): if weight_bytes alone exceeds the VMEM budget (very wide layers on v7x's
    # 64 MiB/TC), stream the weights with pltpu.emit_pipeline instead of keeping all layers
    # resident; not needed at these sizes.

    grid = (pl.cdiv(M, tm),)
    kernel = _make_fused_mlp_kernel(n_layers, compute_dtype)

    flops = 2 * M * sum(w.shape[0] * w.shape[1] for w, _ in padded_params)
    bytes_accessed = M * K0 * x_itemsize + weight_bytes + M * N_last_pad * x_itemsize
    cost = pl.CostEstimate(flops=flops, transcendentals=0, bytes_accessed=bytes_accessed)

    def build_and_call(single_buffer_weights):
        const_kwargs = (dict(pipeline_mode=pl.Buffered(1)) if single_buffer_weights else {})
        in_specs = [pl.BlockSpec((tm, K0), lambda i: (i, 0))]   # batch-tiled activations
        operands = [x2]
        for w_pad, b_pad in padded_params:
            Kp, Np = w_pad.shape
            # Weights / biases fully VMEM-resident across the whole grid.
            in_specs.append(pl.BlockSpec((Kp, Np), lambda i: (0, 0), **const_kwargs))
            in_specs.append(pl.BlockSpec((1, Np), lambda i: (0, 0), **const_kwargs))
            operands.append(w_pad)
            operands.append(b_pad)
        w_bufs = 1 if single_buffer_weights else 2
        vmem_limit = min(int(vmem_capacity * 0.9),
                         max(32 * 1024 * 1024, footprint(tm, w_bufs) + 8 * 1024 * 1024))
        return pl.pallas_call(
            kernel,
            out_shape=jax.ShapeDtypeStruct((M, N_last_pad), x.dtype),
            grid=grid,
            in_specs=in_specs,
            out_specs=pl.BlockSpec((tm, N_last_pad), lambda i: (i, 0)),
            compiler_params=pltpu.CompilerParams(
                dimension_semantics=("parallel",),      # shards batch across TCs on v7x
                vmem_limit_bytes=vmem_limit,
            ),
            cost_estimate=cost,
        )(*operands)

    try:
        out_pad = build_and_call(single_buffer_weights=True)
    except Exception:
        # Fallback: default (double) buffering if Buffered(1) is rejected on this JAX build.
        out_pad = build_and_call(single_buffer_weights=False)

    out = out_pad if N_last_pad == out_features else out_pad[:, :out_features]
    return out.reshape(orig_shape[:-1] + (out_features,))


class FeedForwardBlockPallas:
    """JAX/Pallas equivalent of the PyTorch FeedForwardBlock (Sequential of Linear layers)."""

    def __init__(self, layer_dims, key, compute_dtype=jnp.bfloat16):
        self.layer_dims = list(layer_dims)
        self.output_size = layer_dims[-1]
        self.compute_dtype = compute_dtype
        self.params = []          # torch-layout (out, in) f32 weights + (out,) bias, for reference
        self.padded_params = []   # pre-transposed, lane-padded, compute-dtype weights/biases
        n_layers = len(layer_dims) - 1
        for i in range(n_layers):
            size_in = layer_dims[i]
            size_out = layer_dims[i + 1]
            key, wk, bk = jax.random.split(key, 3)
            # Deterministic init mimicking torch.nn.Linear default
            # (uniform in [-1/sqrt(fan_in), 1/sqrt(fan_in)]).
            bound = 1.0 / (size_in ** 0.5)
            w = jax.random.uniform(wk, (size_out, size_in), jnp.float32,
                                   minval=-bound, maxval=bound)
            b = jax.random.uniform(bk, (size_out,), jnp.float32,
                                   minval=-bound, maxval=bound)
            self.params.append((w, b))

            # One-time host-side transpose + pad. The first layer keeps its true K so the
            # activation input needs no per-call padding; later layers pad K to match the
            # previous layer's lane-padded output width. Zero rows/cols/bias tail keep the
            # padding numerically inert.
            Kp = size_in if i == 0 else _round_up(size_in, _LANE)
            Np = _round_up(size_out, _LANE)
            w_pad = jnp.zeros((Kp, Np), compute_dtype).at[:size_in, :size_out].set(
                w.T.astype(compute_dtype))
            b_pad = jnp.zeros((1, Np), compute_dtype).at[0, :size_out].set(
                b.astype(compute_dtype))
            self.padded_params.append((w_pad, b_pad))

    def __call__(self, x):
        # nn.Sequential of Linear layers (no activations), fused into one kernel.
        return fused_mlp_forward(x, self.padded_params, self.output_size,
                                 compute_dtype=self.compute_dtype)


if __name__ == "__main__":
    key = jax.random.PRNGKey(0)
    key, xk, pk = jax.random.split(key, 3)

    layer_dims = [32, 64, 16]   # variable-depth MLP: 32 -> 64 -> 16
    batch = 8

    model = FeedForwardBlockPallas(layer_dims, pk)
    x = jax.random.normal(xk, (batch, layer_dims[0]), jnp.float32)

    logits = model(x)
    jax.block_until_ready(logits)

    # Sanity check against plain-JAX f32 reference (torch Linear semantics: x @ W^T + b).
    ref = x
    for w, b in model.params:
        ref = ref @ w.T + b
    assert logits.shape == (batch, layer_dims[-1])
    assert logits.dtype == x.dtype
    # bf16 operands with f32 accumulation -> loosened tolerance vs. the f32 reference.
    assert jnp.allclose(logits, ref, atol=5e-2, rtol=5e-2), \
        float(jnp.max(jnp.abs(logits - ref)))

    print("KERNEL_OK")
</pallas_src>

<mosaic_0001>
module attributes {stable_mosaic.version = 11 : i64} {
  func.func @kernel(%arg0: i32, %arg1: memref<8x32xf32, #tpu.memory_space<vmem>>, %arg2: memref<32x128xbf16, #tpu.memory_space<vmem>>, %arg3: memref<1x128xbf16, #tpu.memory_space<vmem>>, %arg4: memref<128x128xbf16, #tpu.memory_space<vmem>>, %arg5: memref<1x128xbf16, #tpu.memory_space<vmem>>, %arg6: memref<8x128xf32, #tpu.memory_space<vmem>>) attributes {dimension_semantics = [#tpu.dimension_semantics<parallel>], iteration_bounds = array<i64: 1>, scalar_prefetch = 0 : i64, scratch_operands = 0 : i64, tpu.core_type = #tpu.core_type<tc>, window_params = [{transform_indices = @transform_0, window_bounds = array<i64: 8, 32>}, {pipeline_mode = #tpu.pipeline_mode<synchronous>, transform_indices = @transform_1, window_bounds = array<i64: 32, 128>}, {pipeline_mode = #tpu.pipeline_mode<synchronous>, transform_indices = @transform_2, window_bounds = array<i64: 1, 128>}, {pipeline_mode = #tpu.pipeline_mode<synchronous>, transform_indices = @transform_3, window_bounds = array<i64: 128, 128>}, {pipeline_mode = #tpu.pipeline_mode<synchronous>, transform_indices = @transform_4, window_bounds = array<i64: 1, 128>}, {transform_indices = @transform_5, window_bounds = array<i64: 8, 128>}]} {
    %c0 = arith.constant 0 : index
    %c0_0 = arith.constant 0 : index
    %0 = vector.load %arg1[%c0, %c0_0] : memref<8x32xf32, #tpu.memory_space<vmem>>, vector<8x32xf32>
    %1 = arith.truncf %0 : vector<8x32xf32> to vector<8x32xbf16>
    %c0_1 = arith.constant 0 : index
    %c0_2 = arith.constant 0 : index
    %2 = vector.load %arg2[%c0_1, %c0_2] : memref<32x128xbf16, #tpu.memory_space<vmem>>, vector<32x128xbf16>
    %cst = arith.constant dense<0.000000e+00> : vector<8x128xf32>
    %3 = tpu.matmul %1, %2, %cst {dimension_numbers = #tpu.dot_dimension_numbers<[1], [0], [0], [1], [0, 0, 1, 1], [], []>} : vector<8x32xbf16>, vector<32x128xbf16>, vector<8x128xf32> -> vector<8x128xf32>
    %c0_3 = arith.constant 0 : index
    %c0_4 = arith.constant 0 : index
    %4 = vector.load %arg3[%c0_3, %c0_4] : memref<1x128xbf16, #tpu.memory_space<vmem>>, vector<1x128xbf16>
    %5 = arith.extf %4 : vector<1x128xbf16> to vector<1x128xf32>
    %6 = vector.broadcast %5 : vector<1x128xf32> to vector<8x128xf32>
    %7 = arith.addf %3, %6 : vector<8x128xf32>
    %8 = arith.truncf %7 : vector<8x128xf32> to vector<8x128xbf16>
    %c0_5 = arith.constant 0 : index
    %c0_6 = arith.constant 0 : index
    %9 = vector.load %arg4[%c0_5, %c0_6] : memref<128x128xbf16, #tpu.memory_space<vmem>>, vector<128x128xbf16>
    %cst_7 = arith.constant dense<0.000000e+00> : vector<8x128xf32>
    %10 = tpu.matmul %8, %9, %cst_7 {dimension_numbers = #tpu.dot_dimension_numbers<[1], [0], [0], [1], [0, 0, 1, 1], [], []>} : vector<8x128xbf16>, vector<128x128xbf16>, vector<8x128xf32> -> vector<8x128xf32>
    %c0_8 = arith.constant 0 : index
    %c0_9 = arith.constant 0 : index
    %11 = vector.load %arg5[%c0_8, %c0_9] : memref<1x128xbf16, #tpu.memory_space<vmem>>, vector<1x128xbf16>
    %12 = arith.extf %11 : vector<1x128xbf16> to vector<1x128xf32>
    %13 = vector.broadcast %12 : vector<1x128xf32> to vector<8x128xf32>
    %14 = arith.addf %10, %13 : vector<8x128xf32>
    %c0_10 = arith.constant 0 : index
    %c0_11 = arith.constant 0 : index
    %15 = vector.load %arg6[%c0_10, %c0_11] : memref<8x128xf32, #tpu.memory_space<vmem>>, vector<8x128xf32>
    tpu.vector_store %arg6[%c0_10, %c0_11], %14 {strides = array<i32>} : memref<8x128xf32, #tpu.memory_space<vmem>>, vector<8x128xf32>,
    return
  }
  func.func @transform_0(%arg0: i32) -> (i32, i32) {
    %c0_i32 = arith.constant 0 : i32
    %c0_i32_0 = arith.constant 0 : i32
    return %arg0, %c0_i32 : i32, i32
  }
  func.func @transform_1(%arg0: i32) -> (i32, i32) {
    %c0_i32 = arith.constant 0 : i32
    %c0_i32_0 = arith.constant 0 : i32
    %c0_i32_1 = arith.constant 0 : i32
    return %c0_i32, %c0_i32_0 : i32, i32
  }
  func.func @transform_2(%arg0: i32) -> (i32, i32) {
    %c0_i32 = arith.constant 0 : i32
    %c0_i32_0 = arith.constant 0 : i32
    %c0_i32_1 = arith.constant 0 : i32
    return %c0_i32, %c0_i32_0 : i32, i32
  }
  func.func @transform_3(%arg0: i32) -> (i32, i32) {
    %c0_i32 = arith.constant 0 : i32
    %c0_i32_0 = arith.constant 0 : i32
    %c0_i32_1 = arith.constant 0 : i32
    return %c0_i32, %c0_i32_0 : i32, i32
  }
  func.func @transform_4(%arg0: i32) -> (i32, i32) {
    %c0_i32 = arith.constant 0 : i32
    %c0_i32_0 = arith.constant 0 : i32
    %c0_i32_1 = arith.constant 0 : i32
    return %c0_i32, %c0_i32_0 : i32, i32
  }
  func.func @transform_5(%arg0: i32) -> (i32, i32) {
    %c0_i32 = arith.constant 0 : i32
    %c0_i32_0 = arith.constant 0 : i32
    return %arg0, %c0_i32 : i32, i32
  }
}

module attributes {stable_mosaic.version = 11 : i64} {
  func.func @kernel(%arg0: i32, %arg1: memref<8x32xf32, #tpu.memory_space<vmem>>, %arg2: memref<32x128xbf16, #tpu.memory_space<vmem>>, %arg3: memref<1x128xbf16, #tpu.memory_space<vmem>>, %arg4: memref<128x128xbf16, #tpu.memory_space<vmem>>, %arg5: memref<1x128xbf16, #tpu.memory_space<vmem>>, %arg6: memref<8x128xf32, #tpu.memory_space<vmem>>) attributes {dimension_semantics = [#tpu.dimension_semantics<parallel>], iteration_bounds = array<i64: 1>, scalar_prefetch = 0 : i64, scratch_operands = 0 : i64, tpu.core_type = #tpu.core_type<tc>, window_params = [{transform_indices = @transform_0, window_bounds = array<i64: 8, 32>}, {pipeline_mode = #tpu.pipeline_mode<synchronous>, transform_indices = @transform_1, window_bounds = array<i64: 32, 128>}, {pipeline_mode = #tpu.pipeline_mode<synchronous>, transform_indices = @transform_2, window_bounds = array<i64: 1, 128>}, {pipeline_mode = #tpu.pipeline_mode<synchronous>, transform_indices = @transform_3, window_bounds = array<i64: 128, 128>}, {pipeline_mode = #tpu.pipeline_mode<synchronous>, transform_indices = @transform_4, window_bounds = array<i64: 1, 128>}, {transform_indices = @transform_5, window_bounds = array<i64: 8, 128>}]} {
    %c0 = arith.constant 0 : index
    %c0_0 = arith.constant 0 : index
    %0 = vector.load %arg1[%c0, %c0_0] : memref<8x32xf32, #tpu.memory_space<vmem>>, vector<8x32xf32>
    %1 = arith.truncf %0 : vector<8x32xf32> to vector<8x32xbf16>
    %c0_1 = arith.constant 0 : index
    %c0_2 = arith.constant 0 : index
    %2 = vector.load %arg2[%c0_1, %c0_2] : memref<32x128xbf16, #tpu.memory_space<vmem>>, vector<32x128xbf16>
    %cst = arith.constant dense<0.000000e+00> : vector<8x128xf32>
    %3 = tpu.matmul %1, %2, %cst {dimension_numbers = #tpu.dot_dimension_numbers<[1], [0], [0], [1], [0, 0, 1, 1], [], []>} : vector<8x32xbf16>, vector<32x128xbf16>, vector<8x128xf32> -> vector<8x128xf32>
    %c0_3 = arith.constant 0 : index
    %c0_4 = arith.constant 0 : index
    %4 = vector.load %arg3[%c0_3, %c0_4] : memref<1x128xbf16, #tpu.memory_space<vmem>>, vector<1x128xbf16>
    %5 = arith.extf %4 : vector<1x128xbf16> to vector<1x128xf32>
    %6 = vector.broadcast %5 : vector<1x128xf32> to vector<8x128xf32>
    %7 = arith.addf %3, %6 : vector<8x128xf32>
    %8 = arith.truncf %7 : vector<8x128xf32> to vector<8x128xbf16>
    %c0_5 = arith.constant 0 : index
    %c0_6 = arith.constant 0 : index
    %9 = vector.load %arg4[%c0_5, %c0_6] : memref<128x128xbf16, #tpu.memory_space<vmem>>, vector<128x128xbf16>
    %cst_7 = arith.constant dense<0.000000e+00> : vector<8x128xf32>
    %10 = tpu.matmul %8, %9, %cst_7 {dimension_numbers = #tpu.dot_dimension_numbers<[1], [0], [0], [1], [0, 0, 1, 1], [], []>} : vector<8x128xbf16>, vector<128x128xbf16>, vector<8x128xf32> -> vector<8x128xf32>
    %c0_8 = arith.constant 0 : index
    %c0_9 = arith.constant 0 : index
    %11 = vector.load %arg5[%c0_8, %c0_9] : memref<1x128xbf16, #tpu.memory_space<vmem>>, vector<1x128xbf16>
    %12 = arith.extf %11 : vector<1x128xbf16> to vector<1x128xf32>
    %13 = vector.broadcast %12 : vector<1x128xf32> to vector<8x128xf32>
    %14 = arith.addf %10, %13 : vector<8x128xf32>
    %c0_10 = arith.constant 0 : index
    %c0_11 = arith.constant 0 : index
    %15 = vector.load %arg6[%c0_10, %c0_11] : memref<8x128xf32, #tpu.memory_space<vmem>>, vector<8x128xf32>
    tpu.vector_store %arg6[%c0_10, %c0_11], %14 {strides = array<i32>} : memref<8x128xf32, #tpu.memory_space<vmem>>, vector<8x128xf32>,
    return
  }
  func.func @transform_0(%arg0: i32) -> (i32, i32) {
    %c0_i32 = arith.constant 0 : i32
    %c0_i32_0 = arith.constant 0 : i32
    return %arg0, %c0_i32 : i32, i32
  }
  func.func @transform_1(%arg0: i32) -> (i32, i32) {
    %c0_i32 = arith.constant 0 : i32
    %c0_i32_0 = arith.constant 0 : i32
    %c0_i32_1 = arith.constant 0 : i32
    return %c0_i32, %c0_i32_0 : i32, i32
  }
  func.func @transform_2(%arg0: i32) -> (i32, i32) {
    %c0_i32 = arith.constant 0 : i32
    %c0_i32_0 = arith.constant 0 : i32
    %c0_i32_1 = arith.constant 0 : i32
    return %c0_i32, %c0_i32_0 : i32, i32
  }
  func.func @transform_3(%arg0: i32) -> (i32, i32) {
    %c0_i32 = arith.constant 0 : i32
    %c0_i32_0 = arith.constant 0 : i32
    %c0_i32_1 = arith.constant 0 : i32
    return %c0_i32, %c0_i32_0 : i32, i32
  }
  func.func @transform_4(%arg0: i32) -> (i32, i32) {
    %c0_i32 = arith.constant 0 : i32
    %c0_i32_0 = arith.constant 0 : i32
    %c0_i32_1 = arith.constant 0 : i32
    return %c0_i32, %c0_i32_0 : i32, i32
  }
  func.func @transform_5(%arg0: i32) -> (i32, i32) {
    %c0_i32 = arith.constant 0 : i32
    %c0_i32_0 = arith.constant 0 : i32
    return %arg0, %c0_i32 : i32, i32
  }
}

</mosaic_0001>

<llo_original>
// kernel: tpu_custom_call.1
$region0: #{tpu_custom_call.1}
  #allocation0 [shape = 'u32[]', space=smem, size = 0x4, offset = 0x4, fixed_abs, tag = 'smem constant byte address 0x4 - core index']
  #allocation1 [shape = 'u32[144,128]{1,0:T(1,128)}', space=vmem, size = 0x12000, scoped, tag = 'internal scratch']
  %s0 = inlined_call_operand.hbm [shape: f32[8,32], index: 0, kind: input, shape index: {}]
  %s1 = inlined_call_operand.hbm [shape: bf16[32,128], index: 1, kind: input, shape index: {}]
  %s2 = inlined_call_operand.vmem [shape: bf16[1,128], index: 2, kind: input, shape index: {}]
  %s3 = inlined_call_operand.hbm [shape: bf16[128,128], index: 3, kind: input, shape index: {}]
  %s4 = inlined_call_operand.vmem [shape: bf16[1,128], index: 4, kind: input, shape index: {}]
  %s5 = inlined_call_operand.hbm [shape: f32[8,128], index: 5, kind: output, shape index: {}]
  %s6 = sld [smem:[#allocation0]]
  $region42: #{tpu_custom_call.1} parent=0
    _
  %s8 = ssub.s32 1, %s6
  %s9 = scalar_select 0, %s8, %s6
  $region1: #{tpu_custom_call.1} parent=0
    #allocation2 [shape = 'u8[4096]{0}', space=vmem, size = 0x1000, scoped, tag = 'input window, operand 0, single buffered']
    #allocation3 [shape = 's32[1]{0}', space=sflag, size = 0x4, scoped, tag = 'scoped memory for tpu_custom_call.1']
    #allocation4 [shape = 's32[1]{0}', space=sflag, size = 0x4, scoped, tag = 'scoped memory for tpu_custom_call.1']
    #allocation5 [shape = 'u8[8192]{0}', space=vmem, size = 0x2000, scoped, tag = 'input window, operand 1, single buffered']
    #allocation6 [shape = 's32[1]{0}', space=sflag, size = 0x4, scoped, tag = 'scoped memory for tpu_custom_call.1']
    #allocation7 [shape = 'u8[32768]{0}', space=vmem, size = 0x8000, scoped, tag = 'input window, operand 3, single buffered']
    #allocation8 [shape = 'u8[4096]{0}', space=vmem, size = 0x1000, scoped, tag = 'output window, operand 0, single buffered']
    %10 = vsyncpa [#allocation3], 0
    %11 = vsyncpa [#allocation6], 0
    %12 = vsyncpa [#allocation4], 0
    // Predicated region
    $region2: #{tpu_custom_call.1} parent=1 // pred_check
      _
    $region3: #{tpu_custom_call.1} parent=1 // pred_check_branch
      %14 = sbr.rel (0) target = $region5
    $region4: #{tpu_custom_call.1} parent=1 // pred_region
      %s16 = ssub.s32 128, 128
      %17 = vsyncadd [#allocation3], %s16
      %s19 = sshll.u32 [#allocation2], 4
      %s20 = int_to_ptr.vmem [resolvable:$true] %s19
      %22 = dma.hbm_to_vmem [thread:$0]  %s0, 128, %s20, [#allocation3]
    $region5: #{tpu_custom_call.1} parent=1 // pred_fallthru
      _
    // Predicated region
    $region6: #{tpu_custom_call.1} parent=1 // pred_check
      _
    $region7: #{tpu_custom_call.1} parent=1 // pred_check_branch
      %24 = sbr.rel (0) target = $region9
    $region8: #{tpu_custom_call.1} parent=1 // pred_region
      %s26 = ssub.s32 256, 256
      %27 = vsyncadd [#allocation6], %s26
      %s28 = sshll.u32 [#allocation5], 4
      %s29 = int_to_ptr.vmem [resolvable:$true] %s28
      %34 = dma.hbm_to_vmem [thread:$0]  %s1, 256, %s29, [#allocation6], 64, 64, 4
    $region9: #{tpu_custom_call.1} parent=1 // pred_fallthru
      _
    // Predicated region
    $region10: #{tpu_custom_call.1} parent=1 // pred_check
      _
    $region11: #{tpu_custom_call.1} parent=1 // pred_check_branch
      %36 = sbr.rel (0) target = $region13
    $region12: #{tpu_custom_call.1} parent=1 // pred_region
      _
    $region13: #{tpu_custom_call.1} parent=1 // pred_fallthru
      _
    // Predicated region
    $region14: #{tpu_custom_call.1} parent=1 // pred_check
      _
    $region15: #{tpu_custom_call.1} parent=1 // pred_check_branch
      %38 = sbr.rel (0) target = $region17
    $region16: #{tpu_custom_call.1} parent=1 // pred_region
      %s40 = ssub.s32 1024, 1024
      %41 = vsyncadd [#allocation6], %s40
      %s42 = sshll.u32 [#allocation7], 4
      %s43 = int_to_ptr.vmem [resolvable:$true] %s42
      %48 = dma.hbm_to_vmem [thread:$0]  %s3, 1024, %s43, [#allocation6], 64, 64, 4
    $region17: #{tpu_custom_call.1} parent=1 // pred_fallthru
      _
    // Predicated region
    $region18: #{tpu_custom_call.1} parent=1 // pred_check
      _
    $region19: #{tpu_custom_call.1} parent=1 // pred_check_branch
      %50 = sbr.rel (0) target = $region21
    $region20: #{tpu_custom_call.1} parent=1 // pred_region
      _
    $region21: #{tpu_custom_call.1} parent=1 // pred_fallthru
      _
    // Predicated region
    $region22: #{tpu_custom_call.1} parent=1 // pred_check
      _
    $region23: #{tpu_custom_call.1} parent=1 // pred_check_branch
      %52 = sbr.rel (0) target = $region25
    $region24: #{tpu_custom_call.1} parent=1 // pred_region
      %53 = dma.done [#allocation3], 128
    $region25: #{tpu_custom_call.1} parent=1 // pred_fallthru
      _
    // Predicated region
    $region26: #{tpu_custom_call.1} parent=1 // pred_check
      _
    $region27: #{tpu_custom_call.1} parent=1 // pred_check_branch
      %55 = sbr.rel (0) target = $region29
    $region28: #{tpu_custom_call.1} parent=1 // pred_region
      %56 = dma.done [#allocation6], 256
    $region29: #{tpu_custom_call.1} parent=1 // pred_fallthru
      _
    // Predicated region
    $region30: #{tpu_custom_call.1} parent=1 // pred_check
      _
    $region31: #{tpu_custom_call.1} parent=1 // pred_check_branch
      %58 = sbr.rel (0) target = $region33
    $region32: #{tpu_custom_call.1} parent=1 // pred_region
      %59 = dma.done [#allocation6], 1024
    $region33: #{tpu_custom_call.1} parent=1 // pred_fallthru
      _
    %v61 = vld [vmem:[#allocation2] sm:$0xff]
    %v62 = vpack.c.bf16 %v61, %v61
    %v63 = vld [vmem:[#allocation5] sm:$0xf]
    %v64 = vld [vmem:[#allocation5 + $0x4] sm:$0xf]
    %v65 = vld [vmem:[#allocation5 + $0x8] sm:$0xf]
    %v66 = vld [vmem:[#allocation5 + $0xc] sm:$0xf]
    %v67 = vld [vmem:[%s2] sm:$0x1]
    %v68 = vunpack.c.l.bf16 %v67
    %v69 = vlaneseq
    %v70 = vshrl.u32 %v69, 7
    %v71 = vsub.s32 0, %v70
    %v72 = vrot.slane %v68, %v71
    %v77 = vunpack.c.l.b16 %v63
    %v78 = vunpack.c.l.b16 %v64
    %v79 = vunpack.c.l.b16 %v65
    %v80 = vunpack.c.l.b16 %v66
    %v81 = vpack.c.b16 %v78, %v77
    %v82 = vpack.c.b16 %v80, %v79
    %vm85 = vcmask 261120
    %v87 = vsel %vm85, %v62, 0
    %89 = vmatprep.subr.bf16.mxu0 0
    %90 = vmatpush1.bf16.msra.mxu0 %v81
    %91 = vmatprep.subr.bf16.mxu0 0
    %92 = vmatpush1.bf16.msra.mxu0 %v82
    %93 = vmatprep.subr.bf16.mxu0 0
    %94 = vmatpush1.bf16.msra.mxu0 0
    %95 = vmatprep.subr.bf16.mxu0 0
    %96 = vmatpush1.bf16.msra.mxu0 0
    %97 = vmatprep.subr.bf16.mxu0 0
    %98 = vmatpush1.bf16.msra.mxu0 0
    %99 = vmatprep.subr.bf16.mxu0 0
    %100 = vmatpush1.bf16.msra.mxu0 0
    %101 = vmatprep.subr.bf16.mxu0 0
    %102 = vmatpush1.bf16.msra.mxu0 0
    %103 = vmatprep.subr.bf16.mxu0 0
    %104 = vmatpush1.bf16.msra.mxu0 0
    %105 = vmatprep.subr.bf16.mxu0 0
    %106 = vmatpush1.bf16.msra.mxu0 0
    %107 = vmatprep.subr.bf16.mxu0 0
    %108 = vmatpush1.bf16.msra.mxu0 0
    %109 = vmatprep.subr.bf16.mxu0 0
    %110 = vmatpush1.bf16.msra.mxu0 0
    %111 = vmatprep.subr.bf16.mxu0 0
    %112 = vmatpush1.bf16.msra.mxu0 0
    %113 = vmatprep.subr.bf16.mxu0 0
    %114 = vmatpush1.bf16.msra.mxu0 0
    %115 = vmatprep.subr.bf16.mxu0 0
    %116 = vmatpush1.bf16.msra.mxu0 0
    %117 = vmatprep.subr.bf16.mxu0 0
    %118 = vmatpush1.bf16.msra.mxu0 0
    %119 = vmatprep.subr.bf16.mxu0 0
    %120 = vmatpush1.bf16.msra.mxu0 0
    %121 = vmatprep.mubr.bf16.mxu0 0
    %122 = vmatmul.mubr.bf16.gmra.mrb[0].mxu0 %v87
    %v123 = vpop.f32.mrb[0].mxu0
    %v124 = vadd.f32 %v72, %v123
    %v125 = vpop.f32.mrb[0].mxu0
    %v126 = vpop.f32.mrb[0].mxu0
    %v127 = vpop.f32.mrb[0].mxu0
    %128 = vdwg.mxu0
    %v129 = vpack.c.bf16 %v124, %v124
    %v130 = vld [vmem:[#allocation7] sm:$0xf]
    %v131 = vld [vmem:[#allocation7 + $0x4] sm:$0xf]
    %v132 = vld [vmem:[#allocation7 + $0x8] sm:$0xf]
    %v133 = vld [vmem:[#allocation7 + $0xc] sm:$0xf]
    %v134 = vld [vmem:[#allocation7 + $0x10] sm:$0xf]
    %v135 = vld [vmem:[#allocation7 + $0x14] sm:$0xf]
    %v136 = vld [vmem:[#allocation7 + $0x18] sm:$0xf]
    %v137 = vld [vmem:[#allocation7 + $0x1c] sm:$0xf]
    %v138 = vld [vmem:[#allocation7 + $0x20] sm:$0xf]
    %v139 = vld [vmem:[#allocation7 + $0x24] sm:$0xf]
    %v140 = vld [vmem:[#allocation7 + $0x28] sm:$0xf]
    %v141 = vld [vmem:[#allocation7 + $0x2c] sm:$0xf]
    %v142 = vld [vmem:[#allocation7 + $0x30] sm:$0xf]
    %v143 = vld [vmem:[#allocation7 + $0x34] sm:$0xf]
    %v144 = vld [vmem:[#allocation7 + $0x38] sm:$0xf]
    %v145 = vld [vmem:[#allocation7 + $0x3c] sm:$0xf]
    %v146 = vld [vmem:[%s4] sm:$0x1]
    %v147 = vunpack.c.l.bf16 %v146
    %v148 = vlaneseq
    %v149 = vshrl.u32 %v148, 7
    %v150 = vsub.s32 0, %v149
    %v151 = vrot.slane %v147, %v150
    %v168 = vunpack.c.l.b16 %v130
    %v169 = vunpack.c.l.b16 %v131
    %v170 = vunpack.c.l.b16 %v132
    %v171 = vunpack.c.l.b16 %v133
    %v172 = vunpack.c.l.b16 %v134
    %v173 = vunpack.c.l.b16 %v135
    %v174 = vunpack.c.l.b16 %v136
    %v175 = vunpack.c.l.b16 %v137
    %v176 = vunpack.c.l.b16 %v138
    %v177 = vunpack.c.l.b16 %v139
    %v178 = vunpack.c.l.b16 %v140
    %v179 = vunpack.c.l.b16 %v141
    %v180 = vunpack.c.l.b16 %v142
    %v181 = vunpack.c.l.b16 %v143
    %v182 = vunpack.c.l.b16 %v144
    %v183 = vunpack.c.l.b16 %v145
    %v184 = vpack.c.b16 %v169, %v168
    %v185 = vpack.c.b16 %v171, %v170
    %v186 = vpack.c.b16 %v173, %v172
    %v187 = vpack.c.b16 %v175, %v174
    %v188 = vpack.c.b16 %v177, %v176
    %v189 = vpack.c.b16 %v179, %v178
    %v190 = vpack.c.b16 %v181, %v180
    %v191 = vpack.c.b16 %v183, %v182
    %200 = vmatprep.subr.bf16.mxu0 0
    %201 = vmatpush1.bf16.msra.mxu0 %v184
    %202 = vmatprep.subr.bf16.mxu0 0
    %203 = vmatpush1.bf16.msra.mxu0 %v185
    %204 = vmatprep.subr.bf16.mxu0 0
    %205 = vmatpush1.bf16.msra.mxu0 %v186
    %206 = vmatprep.subr.bf16.mxu0 0
    %207 = vmatpush1.bf16.msra.mxu0 %v187
    %208 = vmatprep.subr.bf16.mxu0 0
    %209 = vmatpush1.bf16.msra.mxu0 %v188
    %210 = vmatprep.subr.bf16.mxu0 0
    %211 = vmatpush1.bf16.msra.mxu0 %v189
    %212 = vmatprep.subr.bf16.mxu0 0
    %213 = vmatpush1.bf16.msra.mxu0 %v190
    %214 = vmatprep.subr.bf16.mxu0 0
    %215 = vmatpush1.bf16.msra.mxu0 %v191
    %216 = vmatprep.subr.bf16.mxu0 0
    %217 = vmatpush1.bf16.msra.mxu0 0
    %218 = vmatprep.subr.bf16.mxu0 0
    %219 = vmatpush1.bf16.msra.mxu0 0
    %220 = vmatprep.subr.bf16.mxu0 0
    %221 = vmatpush1.bf16.msra.mxu0 0
    %222 = vmatprep.subr.bf16.mxu0 0
    %223 = vmatpush1.bf16.msra.mxu0 0
    %224 = vmatprep.subr.bf16.mxu0 0
    %225 = vmatpush1.bf16.msra.mxu0 0
    %226 = vmatprep.subr.bf16.mxu0 0
    %227 = vmatpush1.bf16.msra.mxu0 0
    %228 = vmatprep.subr.bf16.mxu0 0
    %229 = vmatpush1.bf16.msra.mxu0 0
    %230 = vmatprep.subr.bf16.mxu0 0
    %231 = vmatpush1.bf16.msra.mxu0 0
    %232 = vmatprep.mubr.bf16.mxu0 0
    %233 = vmatmul.mubr.bf16.gmra.mrb[0].mxu0 %v129
    %v234 = vpop.f32.mrb[0].mxu0
    %v235 = vadd.f32 %v151, %v234
    %v236 = vpop.f32.mrb[0].mxu0
    %v237 = vpop.f32.mrb[0].mxu0
    %v238 = vpop.f32.mrb[0].mxu0
    %239 = vdwg.mxu0
    %240 = vst [vmem:[#allocation8] sm:$0xff] %v235
    // Predicated region
    $region34: #{tpu_custom_call.1} parent=1 // pred_check
      _
    $region35: #{tpu_custom_call.1} parent=1 // pred_check_branch
      %242 = sbr.rel (0) target = $region37
    $region36: #{tpu_custom_call.1} parent=1 // pred_region
      %s244 = ssub.s32 128, 128
      %245 = vsyncadd [#allocation4], %s244
      %s247 = sshll.u32 [#allocation8], 4
      %s248 = int_to_ptr.vmem [resolvable:$true] %s247
      %250 = dma.vmem_to_hbm [thread:$0]  %s248, 128, %s5, [#allocation4]
    $region37: #{tpu_custom_call.1} parent=1 // pred_fallthru
      _
    // Predicated region
    $region38: #{tpu_custom_call.1} parent=1 // pred_check
      _
    $region39: #{tpu_custom_call.1} parent=1 // pred_check_branch
      %252 = sbr.rel (0) target = $region41
    $region40: #{tpu_custom_call.1} parent=1 // pred_region
      %253 = dma.done [#allocation4], 128
    $region41: #{tpu_custom_call.1} parent=1 // pred_fallthru
      _
    %254 = vsyncpa [#allocation3], 1
    %255 = vsyncpa [#allocation6], 1
    %256 = vsyncpa [#allocation4], 1

// kernel: tpu_custom_call.1
$region0: #{tpu_custom_call.1}
  #allocation0 [shape = 'u32[]', space=smem, size = 0x4, offset = 0x4, fixed_abs, tag = 'smem constant byte address 0x4 - core index']
  #allocation1 [shape = 'u32[144,128]{1,0:T(1,128)}', space=vmem, size = 0x12000, scoped, tag = 'internal scratch']
  %s0 = inlined_call_operand.hbm [shape: f32[8,32], index: 0, kind: input, shape index: {}]
  %s1 = inlined_call_operand.hbm [shape: bf16[32,128], index: 1, kind: input, shape index: {}]
  %s2 = inlined_call_operand.vmem [shape: bf16[1,128], index: 2, kind: input, shape index: {}]
  %s3 = inlined_call_operand.hbm [shape: bf16[128,128], index: 3, kind: input, shape index: {}]
  %s4 = inlined_call_operand.vmem [shape: bf16[1,128], index: 4, kind: input, shape index: {}]
  %s5 = inlined_call_operand.hbm [shape: f32[8,128], index: 5, kind: output, shape index: {}]
  %s6 = sld [smem:[#allocation0]]
  $region42: #{tpu_custom_call.1} parent=0
    _
  %s8 = ssub.s32 1, %s6
  %s9 = scalar_select 0, %s8, %s6
  $region1: #{tpu_custom_call.1} parent=0
    #allocation2 [shape = 'u8[4096]{0}', space=vmem, size = 0x1000, scoped, tag = 'input window, operand 0, single buffered']
    #allocation3 [shape = 's32[1]{0}', space=sflag, size = 0x4, scoped, tag = 'scoped memory for tpu_custom_call.1']
    #allocation4 [shape = 's32[1]{0}', space=sflag, size = 0x4, scoped, tag = 'scoped memory for tpu_custom_call.1']
    #allocation5 [shape = 'u8[8192]{0}', space=vmem, size = 0x2000, scoped, tag = 'input window, operand 1, single buffered']
    #allocation6 [shape = 's32[1]{0}', space=sflag, size = 0x4, scoped, tag = 'scoped memory for tpu_custom_call.1']
    #allocation7 [shape = 'u8[32768]{0}', space=vmem, size = 0x8000, scoped, tag = 'input window, operand 3, single buffered']
    #allocation8 [shape = 'u8[4096]{0}', space=vmem, size = 0x1000, scoped, tag = 'output window, operand 0, single buffered']
    %10 = vsyncpa [#allocation3], 0
    %11 = vsyncpa [#allocation6], 0
    %12 = vsyncpa [#allocation4], 0
    // Predicated region
    $region2: #{tpu_custom_call.1} parent=1 // pred_check
      _
    $region3: #{tpu_custom_call.1} parent=1 // pred_check_branch
      %14 = sbr.rel (0) target = $region5
    $region4: #{tpu_custom_call.1} parent=1 // pred_region
      %s16 = ssub.s32 128, 128
      %17 = vsyncadd [#allocation3], %s16
      %s19 = sshll.u32 [#allocation2], 4
      %s20 = int_to_ptr.vmem [resolvable:$true] %s19
      %22 = dma.hbm_to_vmem [thread:$0]  %s0, 128, %s20, [#allocation3]
    $region5: #{tpu_custom_call.1} parent=1 // pred_fallthru
      _
    // Predicated region
    $region6: #{tpu_custom_call.1} parent=1 // pred_check
      _
    $region7: #{tpu_custom_call.1} parent=1 // pred_check_branch
      %24 = sbr.rel (0) target = $region9
    $region8: #{tpu_custom_call.1} parent=1 // pred_region
      %s26 = ssub.s32 256, 256
      %27 = vsyncadd [#allocation6], %s26
      %s28 = sshll.u32 [#allocation5], 4
      %s29 = int_to_ptr.vmem [resolvable:$true] %s28
      %34 = dma.hbm_to_vmem [thread:$0]  %s1, 256, %s29, [#allocation6], 64, 64, 4
    $region9: #{tpu_custom_call.1} parent=1 // pred_fallthru
      _
    // Predicated region
    $region10: #{tpu_custom_call.1} parent=1 // pred_check
      _
    $region11: #{tpu_custom_call.1} parent=1 // pred_check_branch
      %36 = sbr.rel (0) target = $region13
    $region12: #{tpu_custom_call.1} parent=1 // pred_region
      _
    $region13: #{tpu_custom_call.1} parent=1 // pred_fallthru
      _
    // Predicated region
    $region14: #{tpu_custom_call.1} parent=1 // pred_check
      _
    $region15: #{tpu_custom_call.1} parent=1 // pred_check_branch
      %38 = sbr.rel (0) target = $region17
    $region16: #{tpu_custom_call.1} parent=1 // pred_region
      %s40 = ssub.s32 1024, 1024
      %41 = vsyncadd [#allocation6], %s40
      %s42 = sshll.u32 [#allocation7], 4
      %s43 = int_to_ptr.vmem [resolvable:$true] %s42
      %48 = dma.hbm_to_vmem [thread:$0]  %s3, 1024, %s43, [#allocation6], 64, 64, 4
    $region17: #{tpu_custom_call.1} parent=1 // pred_fallthru
      _
    // Predicated region
    $region18: #{tpu_custom_call.1} parent=1 // pred_check
      _
    $region19: #{tpu_custom_call.1} parent=1 // pred_check_branch
      %50 = sbr.rel (0) target = $region21
    $region20: #{tpu_custom_call.1} parent=1 // pred_region
      _
    $region21: #{tpu_custom_call.1} parent=1 // pred_fallthru
      _
    // Predicated region
    $region22: #{tpu_custom_call.1} parent=1 // pred_check
      _
    $region23: #{tpu_custom_call.1} parent=1 // pred_check_branch
      %52 = sbr.rel (0) target = $region25
    $region24: #{tpu_custom_call.1} parent=1 // pred_region
      %53 = dma.done [#allocation3], 128
    $region25: #{tpu_custom_call.1} parent=1 // pred_fallthru
      _
    // Predicated region
    $region26: #{tpu_custom_call.1} parent=1 // pred_check
      _
    $region27: #{tpu_custom_call.1} parent=1 // pred_check_branch
      %55 = sbr.rel (0) target = $region29
    $region28: #{tpu_custom_call.1} parent=1 // pred_region
      %56 = dma.done [#allocation6], 256
    $region29: #{tpu_custom_call.1} parent=1 // pred_fallthru
      _
    // Predicated region
    $region30: #{tpu_custom_call.1} parent=1 // pred_check
      _
    $region31: #{tpu_custom_call.1} parent=1 // pred_check_branch
      %58 = sbr.rel (0) target = $region33
    $region32: #{tpu_custom_call.1} parent=1 // pred_region
      %59 = dma.done [#allocation6], 1024
    $region33: #{tpu_custom_call.1} parent=1 // pred_fallthru
      _
    %v61 = vld [vmem:[#allocation2] sm:$0xff]
    %v62 = vpack.c.bf16 %v61, %v61
    %v63 = vld [vmem:[#allocation5] sm:$0xf]
    %v64 = vld [vmem:[#allocation5 + $0x4] sm:$0xf]
    %v65 = vld [vmem:[#allocation5 + $0x8] sm:$0xf]
    %v66 = vld [vmem:[#allocation5 + $0xc] sm:$0xf]
    %v67 = vld [vmem:[%s2] sm:$0x1]
    %v68 = vunpack.c.l.bf16 %v67
    %v69 = vlaneseq
    %v70 = vshrl.u32 %v69, 7
    %v71 = vsub.s32 0, %v70
    %v72 = vrot.slane %v68, %v71
    %v77 = vunpack.c.l.b16 %v63
    %v78 = vunpack.c.l.b16 %v64
    %v79 = vunpack.c.l.b16 %v65
    %v80 = vunpack.c.l.b16 %v66
    %v81 = vpack.c.b16 %v78, %v77
    %v82 = vpack.c.b16 %v80, %v79
    %vm85 = vcmask 261120
    %v87 = vsel %vm85, %v62, 0
    %89 = vmatprep.subr.bf16.mxu0 0
    %90 = vmatpush1.bf16.msra.mxu0 %v81
    %91 = vmatprep.subr.bf16.mxu0 0
    %92 = vmatpush1.bf16.msra.mxu0 %v82
    %93 = vmatprep.subr.bf16.mxu0 0
    %94 = vmatpush1.bf16.msra.mxu0 0
    %95 = vmatprep.subr.bf16.mxu0 0
    %96 = vmatpush1.bf16.msra.mxu0 0
    %97 = vmatprep.subr.bf16.mxu0 0
    %98 = vmatpush1.bf16.msra.mxu0 0
    %99 = vmatprep.subr.bf16.mxu0 0
    %100 = vmatpush1.bf16.msra.mxu0 0
    %101 = vmatprep.subr.bf16.mxu0 0
    %102 = vmatpush1.bf16.msra.mxu0 0
    %103 = vmatprep.subr.bf16.mxu0 0
    %104 = vmatpush1.bf16.msra.mxu0 0
    %105 = vmatprep.subr.bf16.mxu0 0
    %106 = vmatpush1.bf16.msra.mxu0 0
    %107 = vmatprep.subr.bf16.mxu0 0
    %108 = vmatpush1.bf16.msra.mxu0 0
    %109 = vmatprep.subr.bf16.mxu0 0
    %110 = vmatpush1.bf16.msra.mxu0 0
    %111 = vmatprep.subr.bf16.mxu0 0
    %112 = vmatpush1.bf16.msra.mxu0 0
    %113 = vmatprep.subr.bf16.mxu0 0
    %114 = vmatpush1.bf16.msra.mxu0 0
    %115 = vmatprep.subr.bf16.mxu0 0
    %116 = vmatpush1.bf16.msra.mxu0 0
    %117 = vmatprep.subr.bf16.mxu0 0
    %118 = vmatpush1.bf16.msra.mxu0 0
    %119 = vmatprep.subr.bf16.mxu0 0
    %120 = vmatpush1.bf16.msra.mxu0 0
    %121 = vmatprep.mubr.bf16.mxu0 0
    %122 = vmatmul.mubr.bf16.gmra.mrb[0].mxu0 %v87
    %v123 = vpop.f32.mrb[0].mxu0
    %v124 = vadd.f32 %v72, %v123
    %v125 = vpop.f32.mrb[0].mxu0
    %v126 = vpop.f32.mrb[0].mxu0
    %v127 = vpop.f32.mrb[0].mxu0
    %128 = vdwg.mxu0
    %v129 = vpack.c.bf16 %v124, %v124
    %v130 = vld [vmem:[#allocation7] sm:$0xf]
    %v131 = vld [vmem:[#allocation7 + $0x4] sm:$0xf]
    %v132 = vld [vmem:[#allocation7 + $0x8] sm:$0xf]
    %v133 = vld [vmem:[#allocation7 + $0xc] sm:$0xf]
    %v134 = vld [vmem:[#allocation7 + $0x10] sm:$0xf]
    %v135 = vld [vmem:[#allocation7 + $0x14] sm:$0xf]
    %v136 = vld [vmem:[#allocation7 + $0x18] sm:$0xf]
    %v137 = vld [vmem:[#allocation7 + $0x1c] sm:$0xf]
    %v138 = vld [vmem:[#allocation7 + $0x20] sm:$0xf]
    %v139 = vld [vmem:[#allocation7 + $0x24] sm:$0xf]
    %v140 = vld [vmem:[#allocation7 + $0x28] sm:$0xf]
    %v141 = vld [vmem:[#allocation7 + $0x2c] sm:$0xf]
    %v142 = vld [vmem:[#allocation7 + $0x30] sm:$0xf]
    %v143 = vld [vmem:[#allocation7 + $0x34] sm:$0xf]
    %v144 = vld [vmem:[#allocation7 + $0x38] sm:$0xf]
    %v145 = vld [vmem:[#allocation7 + $0x3c] sm:$0xf]
    %v146 = vld [vmem:[%s4] sm:$0x1]
    %v147 = vunpack.c.l.bf16 %v146
    %v148 = vlaneseq
    %v149 = vshrl.u32 %v148, 7
    %v150 = vsub.s32 0, %v149
    %v151 = vrot.slane %v147, %v150
    %v168 = vunpack.c.l.b16 %v130
    %v169 = vunpack.c.l.b16 %v131
    %v170 = vunpack.c.l.b16 %v132
    %v171 = vunpack.c.l.b16 %v133
    %v172 = vunpack.c.l.b16 %v134
    %v173 = vunpack.c.l.b16 %v135
    %v174 = vunpack.c.l.b16 %v136
    %v175 = vunpack.c.l.b16 %v137
    %v176 = vunpack.c.l.b16 %v138
    %v177 = vunpack.c.l.b16 %v139
    %v178 = vunpack.c.l.b16 %v140
    %v179 = vunpack.c.l.b16 %v141
    %v180 = vunpack.c.l.b16 %v142
    %v181 = vunpack.c.l.b16 %v143
    %v182 = vunpack.c.l.b16 %v144
    %v183 = vunpack.c.l.b16 %v145
    %v184 = vpack.c.b16 %v169, %v168
    %v185 = vpack.c.b16 %v171, %v170
    %v186 = vpack.c.b16 %v173, %v172
    %v187 = vpack.c.b16 %v175, %v174
    %v188 = vpack.c.b16 %v177, %v176
    %v189 = vpack.c.b16 %v179, %v178
    %v190 = vpack.c.b16 %v181, %v180
    %v191 = vpack.c.b16 %v183, %v182
    %200 = vmatprep.subr.bf16.mxu0 0
    %201 = vmatpush1.bf16.msra.mxu0 %v184
    %202 = vmatprep.subr.bf16.mxu0 0
    %203 = vmatpush1.bf16.msra.mxu0 %v185
    %204 = vmatprep.subr.bf16.mxu0 0
    %205 = vmatpush1.bf16.msra.mxu0 %v186
    %206 = vmatprep.subr.bf16.mxu0 0
    %207 = vmatpush1.bf16.msra.mxu0 %v187
    %208 = vmatprep.subr.bf16.mxu0 0
    %209 = vmatpush1.bf16.msra.mxu0 %v188
    %210 = vmatprep.subr.bf16.mxu0 0
    %211 = vmatpush1.bf16.msra.mxu0 %v189
    %212 = vmatprep.subr.bf16.mxu0 0
    %213 = vmatpush1.bf16.msra.mxu0 %v190
    %214 = vmatprep.subr.bf16.mxu0 0
    %215 = vmatpush1.bf16.msra.mxu0 %v191
    %216 = vmatprep.subr.bf16.mxu0 0
    %217 = vmatpush1.bf16.msra.mxu0 0
    %218 = vmatprep.subr.bf16.mxu0 0
    %219 = vmatpush1.bf16.msra.mxu0 0
    %220 = vmatprep.subr.bf16.mxu0 0
    %221 = vmatpush1.bf16.msra.mxu0 0
    %222 = vmatprep.subr.bf16.mxu0 0
    %223 = vmatpush1.bf16.msra.mxu0 0
    %224 = vmatprep.subr.bf16.mxu0 0
    %225 = vmatpush1.bf16.msra.mxu0 0
    %226 = vmatprep.subr.bf16.mxu0 0
    %227 = vmatpush1.bf16.msra.mxu0 0
    %228 = vmatprep.subr.bf16.mxu0 0
    %229 = vmatpush1.bf16.msra.mxu0 0
    %230 = vmatprep.subr.bf16.mxu0 0
    %231 = vmatpush1.bf16.msra.mxu0 0
    %232 = vmatprep.mubr.bf16.mxu0 0
    %233 = vmatmul.mubr.bf16.gmra.mrb[0].mxu0 %v129
    %v234 = vpop.f32.mrb[0].mxu0
    %v235 = vadd.f32 %v151, %v234
    %v236 = vpop.f32.mrb[0].mxu0
    %v237 = vpop.f32.mrb[0].mxu0
    %v238 = vpop.f32.mrb[0].mxu0
    %239 = vdwg.mxu0
    %240 = vst [vmem:[#allocation8] sm:$0xff] %v235
    // Predicated region
    $region34: #{tpu_custom_call.1} parent=1 // pred_check
      _
    $region35: #{tpu_custom_call.1} parent=1 // pred_check_branch
      %242 = sbr.rel (0) target = $region37
    $region36: #{tpu_custom_call.1} parent=1 // pred_region
      %s244 = ssub.s32 128, 128
      %245 = vsyncadd [#allocation4], %s244
      %s247 = sshll.u32 [#allocation8], 4
      %s248 = int_to_ptr.vmem [resolvable:$true] %s247
      %250 = dma.vmem_to_hbm [thread:$0]  %s248, 128, %s5, [#allocation4]
    $region37: #{tpu_custom_call.1} parent=1 // pred_fallthru
      _
    // Predicated region
    $region38: #{tpu_custom_call.1} parent=1 // pred_check
      _
    $region39: #{tpu_custom_call.1} parent=1 // pred_check_branch
      %252 = sbr.rel (0) target = $region41
    $region40: #{tpu_custom_call.1} parent=1 // pred_region
      %253 = dma.done [#allocation4], 128
    $region41: #{tpu_custom_call.1} parent=1 // pred_fallthru
      _
    %254 = vsyncpa [#allocation3], 1
    %255 = vsyncpa [#allocation6], 1
    %256 = vsyncpa [#allocation4], 1

</llo_original>
